<compile_context>
chip_gen: v6e
topology: v6e:2x2x1
jax: 0.10.0
libtpu: 0.0.40
codegen_flags: <defaults>
</compile_context>

<pallas_src>
import functools

import jax
import jax.numpy as jnp
from jax import lax
from jax.experimental import pallas as pl
from jax.experimental.pallas import tpu as pltpu


# ----------------------------------------------------------------------------
# Fused kernel: per batch element b
#   x:    [1, Cin, HW]        input, NCHW flattened (identity for the residual)
#   w1:   [Cmid, Cin]         conv1 weights, BN1 scale folded
#   b1:   [Cmid, 1]
#   w2:   [9*Cmid, Cmid]      conv2 3x3 weights (tap-major, kh*3+kw), BN2 folded
#   b2:   [Cmid, 1]
#   w3:   [Cout, Cmid]        conv3 weights, BN3 scale folded
#   b3:   [Cout, 1]
#   m:    [9, 1, HW]          per-tap validity masks (0/1) for the 3x3 conv
#   out:  [1, Cout, HW]
# ----------------------------------------------------------------------------
def bottleneck_kernel(x_ref, w1_ref, b1_ref, w2_ref, b2_ref, w3_ref, b3_ref,
                      m_ref, o_ref, *, H, W):
    HW = H * W
    Cmid = w1_ref.shape[0]

    x = x_ref[0]                                                  # (Cin, HW)

    # ---- conv1 (1x1) + BN1 + ReLU ----
    h1 = jnp.dot(w1_ref[...], x, preferred_element_type=jnp.float32)
    h1 = jnp.maximum(h1 + b1_ref[...], 0.0)                       # (Cmid, HW)

    # ---- conv2 (3x3, pad=1) + BN2 + ReLU ----
    # One stacked matmul over all 9 taps, then per-tap lane shift + mask.
    z_all = jnp.dot(w2_ref[...], h1,
                    preferred_element_type=jnp.float32)           # (9*Cmid, HW)
    acc = z_all[4 * Cmid:5 * Cmid, :]                             # center tap
    for dh in (-1, 0, 1):
        for dw in (-1, 0, 1):
            if dh == 0 and dw == 0:
                continue
            k = (dh + 1) * 3 + (dw + 1)
            off = dh * W + dw                                     # flat offset
            z = z_all[k * Cmid:(k + 1) * Cmid, :]                 # (Cmid, HW)
            z = pltpu.roll(z, (-off) % HW, axis=1)                # z[:, i+off]
            acc = acc + z * m_ref[k]                              # zero padding
    h2 = jnp.maximum(acc + b2_ref[...], 0.0)                      # (Cmid, HW)

    # ---- conv3 (1x1) + BN3 + residual + ReLU ----
    y = jnp.dot(w3_ref[...], h2, preferred_element_type=jnp.float32)
    y = y + b3_ref[...] + x
    o_ref[0] = jnp.maximum(y, 0.0).astype(o_ref.dtype)


# ----------------------------------------------------------------------------
# Wrapper: PyTorch-facing NCHW in / NCHW out (no layout transposes needed).
# ----------------------------------------------------------------------------
def bottleneck_pallas(x_nchw,
                      w1, g1, b1, m1, v1,
                      w2, g2, b2, m2, v2,
                      w3, g3, b3, m3, v3,
                      eps=1e-5):
    B, Cin, H, W = x_nchw.shape
    width = w1.shape[0]
    Cout = w3.shape[0]
    HW = H * W
    assert w1.shape == (width, Cin, 1, 1)
    assert w2.shape == (width, width, 3, 3)
    assert w3.shape == (Cout, width, 1, 1)
    assert Cin == Cout, "downsample=None path requires inplanes == planes*expansion"

    f32 = jnp.float32

    # ---- fold inference-mode BatchNorm into weights / bias (tiny host ops) ----
    s1 = g1 / jnp.sqrt(v1 + eps)
    w1f = (w1.reshape(width, Cin) * s1[:, None]).astype(f32)          # [Cmid, Cin]
    b1f = (b1 - m1 * s1).reshape(width, 1).astype(f32)

    s2 = g2 / jnp.sqrt(v2 + eps)
    w2f = (jnp.transpose(w2, (2, 3, 0, 1)) * s2[None, None, :, None])  # [3,3,out,in]
    w2f = w2f.reshape(9 * width, width).astype(f32)                    # tap-major rows
    b2f = (b2 - m2 * s2).reshape(width, 1).astype(f32)

    s3 = g3 / jnp.sqrt(v3 + eps)
    w3f = (w3.reshape(Cout, width) * s3[:, None]).astype(f32)          # [Cout, Cmid]
    b3f = (b3 - m3 * s3).reshape(Cout, 1).astype(f32)

    # ---- per-tap validity masks for the padded 3x3 conv (flattened HW) ----
    ii = jnp.arange(HW, dtype=jnp.int32)
    hh, ww = ii // W, ii % W
    masks = jnp.stack(
        [(((hh + dh) >= 0) & ((hh + dh) < H) &
          ((ww + dw) >= 0) & ((ww + dw) < W)).astype(f32).reshape(1, HW)
         for dh in (-1, 0, 1) for dw in (-1, 0, 1)],
        axis=0)                                                        # [9,1,HW]

    x_flat = x_nchw.reshape(B, Cin, HW).astype(f32)                    # no-op view

    out = pl.pallas_call(
        functools.partial(bottleneck_kernel, H=H, W=W),
        out_shape=jax.ShapeDtypeStruct((B, Cout, HW), f32),
        grid=(B,),
        in_specs=[
            pl.BlockSpec((1, Cin, HW), lambda b: (b, 0, 0)),
            pl.BlockSpec((width, Cin), lambda b: (0, 0)),
            pl.BlockSpec((width, 1), lambda b: (0, 0)),
            pl.BlockSpec((9 * width, width), lambda b: (0, 0)),
            pl.BlockSpec((width, 1), lambda b: (0, 0)),
            pl.BlockSpec((Cout, width), lambda b: (0, 0)),
            pl.BlockSpec((Cout, 1), lambda b: (0, 0)),
            pl.BlockSpec((9, 1, HW), lambda b: (0, 0, 0)),
        ],
        out_specs=pl.BlockSpec((1, Cout, HW), lambda b: (b, 0, 0)),
        compiler_params=pltpu.CompilerParams(dimension_semantics=("parallel",)),
    )(x_flat, w1f, b1f, w2f, b2f, w3f, b3f, masks)

    return out.reshape(B, Cout, H, W)


# ----------------------------------------------------------------------------
# Pure-JAX reference (lax convs, inference-mode BN) for correctness check.
# ----------------------------------------------------------------------------
def bottleneck_ref(x,
                   w1, g1, b1, m1, v1,
                   w2, g2, b2, m2, v2,
                   w3, g3, b3, m3, v3,
                   eps=1e-5):
    def bn(y, g, b, m, v):
        s = g / jnp.sqrt(v + eps)
        return y * s[None, :, None, None] + (b - m * s)[None, :, None, None]

    dn = ("NCHW", "OIHW", "NCHW")
    y = lax.conv_general_dilated(x, w1, (1, 1), "VALID", dimension_numbers=dn)
    y = jnp.maximum(bn(y, g1, b1, m1, v1), 0.0)
    y = lax.conv_general_dilated(y, w2, (1, 1), ((1, 1), (1, 1)), dimension_numbers=dn)
    y = jnp.maximum(bn(y, g2, b2, m2, v2), 0.0)
    y = lax.conv_general_dilated(y, w3, (1, 1), "VALID", dimension_numbers=dn)
    y = bn(y, g3, b3, m3, v3) + x
    return jnp.maximum(y, 0.0)


if __name__ == "__main__":
    key = jax.random.PRNGKey(0)
    ks = jax.random.split(key, 16)

    # Bottleneck(inplanes=64, planes=16): width=16, out channels=64 == inplanes,
    # so downsample=None is valid.
    B, H, W = 2, 16, 16
    planes = 16
    width = planes
    inplanes = planes * 4
    Cout = planes * 4

    x = jax.random.normal(ks[0], (B, inplanes, H, W), dtype=jnp.float32)

    w1 = jax.random.normal(ks[1], (width, inplanes, 1, 1), dtype=jnp.float32) * 0.1
    w2 = jax.random.normal(ks[2], (width, width, 3, 3), dtype=jnp.float32) * 0.1
    w3 = jax.random.normal(ks[3], (Cout, width, 1, 1), dtype=jnp.float32) * 0.1

    def make_bn(kg, kb, km, kv, c):
        g = 1.0 + 0.1 * jax.random.normal(kg, (c,), dtype=jnp.float32)
        b = 0.1 * jax.random.normal(kb, (c,), dtype=jnp.float32)
        m = 0.05 * jax.random.normal(km, (c,), dtype=jnp.float32)
        v = 1.0 + 0.1 * jax.random.uniform(kv, (c,), dtype=jnp.float32)
        return g, b, m, v

    g1, b1, m1, v1 = make_bn(ks[4], ks[5], ks[6], ks[7], width)
    g2, b2, m2, v2 = make_bn(ks[8], ks[9], ks[10], ks[11], width)
    g3, b3, m3, v3 = make_bn(ks[12], ks[13], ks[14], ks[15], Cout)
    # TODO(synk): PyTorch BatchNorm2d in train mode uses per-batch statistics;
    # this implements the standard inference-mode (running-stats) semantics.

    fwd = jax.jit(bottleneck_pallas)
    out = fwd(x,
              w1, g1, b1, m1, v1,
              w2, g2, b2, m2, v2,
              w3, g3, b3, m3, v3)
    out = jax.block_until_ready(out)

    ref = bottleneck_ref(x,
                         w1, g1, b1, m1, v1,
                         w2, g2, b2, m2, v2,
                         w3, g3, b3, m3, v3)

    assert out.shape == (B, Cout, H, W), out.shape
    err = float(jnp.max(jnp.abs(out - ref)))
    assert jnp.allclose(out, ref, atol=2e-3, rtol=2e-3), err

    print("KERNEL_OK")
</pallas_src>

<mosaic_0001>
module attributes {stable_mosaic.version = 11 : i64} {
  func.func @bottleneck_kernel(%arg0: i32, %arg1: memref<1x64x256xf32, #tpu.memory_space<vmem>>, %arg2: memref<16x64xf32, #tpu.memory_space<vmem>>, %arg3: memref<16x1xf32, #tpu.memory_space<vmem>>, %arg4: memref<144x16xf32, #tpu.memory_space<vmem>>, %arg5: memref<16x1xf32, #tpu.memory_space<vmem>>, %arg6: memref<64x16xf32, #tpu.memory_space<vmem>>, %arg7: memref<64x1xf32, #tpu.memory_space<vmem>>, %arg8: memref<9x1x256xf32, #tpu.memory_space<vmem>>, %arg9: memref<1x64x256xf32, #tpu.memory_space<vmem>>) attributes {dimension_semantics = [#tpu.dimension_semantics<parallel>], iteration_bounds = array<i64: 2>, scalar_prefetch = 0 : i64, scratch_operands = 0 : i64, tpu.core_type = #tpu.core_type<tc>, window_params = [{transform_indices = @transform_0, window_bounds = array<i64: 1, 64, 256>}, {pipeline_mode = #tpu.pipeline_mode<synchronous>, transform_indices = @transform_1, window_bounds = array<i64: 16, 64>}, {pipeline_mode = #tpu.pipeline_mode<synchronous>, transform_indices = @transform_2, window_bounds = array<i64: 16, 1>}, {pipeline_mode = #tpu.pipeline_mode<synchronous>, transform_indices = @transform_3, window_bounds = array<i64: 144, 16>}, {pipeline_mode = #tpu.pipeline_mode<synchronous>, transform_indices = @transform_4, window_bounds = array<i64: 16, 1>}, {pipeline_mode = #tpu.pipeline_mode<synchronous>, transform_indices = @transform_5, window_bounds = array<i64: 64, 16>}, {pipeline_mode = #tpu.pipeline_mode<synchronous>, transform_indices = @transform_6, window_bounds = array<i64: 64, 1>}, {pipeline_mode = #tpu.pipeline_mode<synchronous>, transform_indices = @transform_7, window_bounds = array<i64: 9, 1, 256>}, {transform_indices = @transform_8, window_bounds = array<i64: 1, 64, 256>}]} {
    %c0 = arith.constant 0 : index
    %c0_0 = arith.constant 0 : index
    %c0_1 = arith.constant 0 : index
    %0 = vector.load %arg1[%c0, %c0_0, %c0_1] : memref<1x64x256xf32, #tpu.memory_space<vmem>>, vector<1x64x256xf32>
    %1 = vector.shape_cast %0 : vector<1x64x256xf32> to vector<64x256xf32>
    %c0_2 = arith.constant 0 : index
    %c0_3 = arith.constant 0 : index
    %2 = vector.load %arg2[%c0_2, %c0_3] : memref<16x64xf32, #tpu.memory_space<vmem>>, vector<16x64xf32>
    %cst = arith.constant dense<0.000000e+00> : vector<16x256xf32>
    %3 = tpu.matmul %2, %1, %cst {dimension_numbers = #tpu.dot_dimension_numbers<[1], [0], [0], [1], [0, 0, 1, 1], [], []>} : vector<16x64xf32>, vector<64x256xf32>, vector<16x256xf32> -> vector<16x256xf32>
    %c0_4 = arith.constant 0 : index
    %c0_5 = arith.constant 0 : index
    %4 = vector.load %arg3[%c0_4, %c0_5] : memref<16x1xf32, #tpu.memory_space<vmem>>, vector<16x1xf32>
    %5 = vector.broadcast %4 : vector<16x1xf32> to vector<16x256xf32>
    %6 = arith.addf %3, %5 : vector<16x256xf32>
    %cst_6 = arith.constant 0.000000e+00 : f32
    %7 = vector.broadcast %cst_6 : f32 to vector<16x256xf32>
    %8 = arith.maximumf %6, %7 : vector<16x256xf32>
    %c0_7 = arith.constant 0 : index
    %c0_8 = arith.constant 0 : index
    %9 = vector.load %arg4[%c0_7, %c0_8] : memref<144x16xf32, #tpu.memory_space<vmem>>, vector<144x16xf32>
    %cst_9 = arith.constant dense<0.000000e+00> : vector<144x256xf32>
    %10 = tpu.matmul %9, %8, %cst_9 {dimension_numbers = #tpu.dot_dimension_numbers<[1], [0], [0], [1], [0, 0, 1, 1], [], []>} : vector<144x16xf32>, vector<16x256xf32>, vector<144x256xf32> -> vector<144x256xf32>
    %11 = vector.extract_strided_slice %10 {offsets = [64, 0], sizes = [16, 256], strides = [1, 1]} : vector<144x256xf32> to vector<16x256xf32>
    %12 = vector.extract_strided_slice %10 {offsets = [0, 0], sizes = [16, 256], strides = [1, 1]} : vector<144x256xf32> to vector<16x256xf32>
    %c17_i32 = arith.constant 17 : i32
    %13 = tpu.dynamic_rotate %12 by %c17_i32 dim 1 : vector<16x256xf32>, i32 -> vector<16x256xf32>
    %c0_10 = arith.constant 0 : index
    %c0_11 = arith.constant 0 : index
    %c0_12 = arith.constant 0 : index
    %14 = vector.load %arg8[%c0_10, %c0_11, %c0_12] : memref<9x1x256xf32, #tpu.memory_space<vmem>>, vector<1x1x256xf32>
    %15 = vector.shape_cast %14 : vector<1x1x256xf32> to vector<1x256xf32>
    %16 = vector.broadcast %15 : vector<1x256xf32> to vector<16x256xf32>
    %17 = arith.mulf %13, %16 : vector<16x256xf32>
    %18 = arith.addf %11, %17 : vector<16x256xf32>
    %19 = vector.extract_strided_slice %10 {offsets = [16, 0], sizes = [16, 256], strides = [1, 1]} : vector<144x256xf32> to vector<16x256xf32>
    %c16_i32 = arith.constant 16 : i32
    %20 = tpu.dynamic_rotate %19 by %c16_i32 dim 1 : vector<16x256xf32>, i32 -> vector<16x256xf32>
    %c1 = arith.constant 1 : index
    %c0_13 = arith.constant 0 : index
    %c0_14 = arith.constant 0 : index
    %21 = vector.load %arg8[%c1, %c0_13, %c0_14] : memref<9x1x256xf32, #tpu.memory_space<vmem>>, vector<1x1x256xf32>
    %22 = vector.shape_cast %21 : vector<1x1x256xf32> to vector<1x256xf32>
    %23 = vector.broadcast %22 : vector<1x256xf32> to vector<16x256xf32>
    %24 = arith.mulf %20, %23 : vector<16x256xf32>
    %25 = arith.addf %18, %24 : vector<16x256xf32>
    %26 = vector.extract_strided_slice %10 {offsets = [32, 0], sizes = [16, 256], strides = [1, 1]} : vector<144x256xf32> to vector<16x256xf32>
    %c15_i32 = arith.constant 15 : i32
    %27 = tpu.dynamic_rotate %26 by %c15_i32 dim 1 : vector<16x256xf32>, i32 -> vector<16x256xf32>
    %c2 = arith.constant 2 : index
    %c0_15 = arith.constant 0 : index
    %c0_16 = arith.constant 0 : index
    %28 = vector.load %arg8[%c2, %c0_15, %c0_16] : memref<9x1x256xf32, #tpu.memory_space<vmem>>, vector<1x1x256xf32>
    %29 = vector.shape_cast %28 : vector<1x1x256xf32> to vector<1x256xf32>
    %30 = vector.broadcast %29 : vector<1x256xf32> to vector<16x256xf32>
    %31 = arith.mulf %27, %30 : vector<16x256xf32>
    %32 = arith.addf %25, %31 : vector<16x256xf32>
    %33 = vector.extract_strided_slice %10 {offsets = [48, 0], sizes = [16, 256], strides = [1, 1]} : vector<144x256xf32> to vector<16x256xf32>
    %c1_i32 = arith.constant 1 : i32
    %34 = tpu.dynamic_rotate %33 by %c1_i32 dim 1 : vector<16x256xf32>, i32 -> vector<16x256xf32>
    %c3 = arith.constant 3 : index
    %c0_17 = arith.constant 0 : index
    %c0_18 = arith.constant 0 : index
    %35 = vector.load %arg8[%c3, %c0_17, %c0_18] : memref<9x1x256xf32, #tpu.memory_space<vmem>>, vector<1x1x256xf32>
    %36 = vector.shape_cast %35 : vector<1x1x256xf32> to vector<1x256xf32>
    %37 = vector.broadcast %36 : vector<1x256xf32> to vector<16x256xf32>
    %38 = arith.mulf %34, %37 : vector<16x256xf32>
    %39 = arith.addf %32, %38 : vector<16x256xf32>
    %40 = vector.extract_strided_slice %10 {offsets = [80, 0], sizes = [16, 256], strides = [1, 1]} : vector<144x256xf32> to vector<16x256xf32>
    %c255_i32 = arith.constant 255 : i32
    %41 = tpu.dynamic_rotate %40 by %c255_i32 dim 1 : vector<16x256xf32>, i32 -> vector<16x256xf32>
    %c5 = arith.constant 5 : index
    %c0_19 = arith.constant 0 : index
    %c0_20 = arith.constant 0 : index
    %42 = vector.load %arg8[%c5, %c0_19, %c0_20] : memref<9x1x256xf32, #tpu.memory_space<vmem>>, vector<1x1x256xf32>
    %43 = vector.shape_cast %42 : vector<1x1x256xf32> to vector<1x256xf32>
    %44 = vector.broadcast %43 : vector<1x256xf32> to vector<16x256xf32>
    %45 = arith.mulf %41, %44 : vector<16x256xf32>
    %46 = arith.addf %39, %45 : vector<16x256xf32>
    %47 = vector.extract_strided_slice %10 {offsets = [96, 0], sizes = [16, 256], strides = [1, 1]} : vector<144x256xf32> to vector<16x256xf32>
    %c241_i32 = arith.constant 241 : i32
    %48 = tpu.dynamic_rotate %47 by %c241_i32 dim 1 : vector<16x256xf32>, i32 -> vector<16x256xf32>
    %c6 = arith.constant 6 : index
    %c0_21 = arith.constant 0 : index
    %c0_22 = arith.constant 0 : index
    %49 = vector.load %arg8[%c6, %c0_21, %c0_22] : memref<9x1x256xf32, #tpu.memory_space<vmem>>, vector<1x1x256xf32>
    %50 = vector.shape_cast %49 : vector<1x1x256xf32> to vector<1x256xf32>
    %51 = vector.broadcast %50 : vector<1x256xf32> to vector<16x256xf32>
    %52 = arith.mulf %48, %51 : vector<16x256xf32>
    %53 = arith.addf %46, %52 : vector<16x256xf32>
    %54 = vector.extract_strided_slice %10 {offsets = [112, 0], sizes = [16, 256], strides = [1, 1]} : vector<144x256xf32> to vector<16x256xf32>
    %c240_i32 = arith.constant 240 : i32
    %55 = tpu.dynamic_rotate %54 by %c240_i32 dim 1 : vector<16x256xf32>, i32 -> vector<16x256xf32>
    %c7 = arith.constant 7 : index
    %c0_23 = arith.constant 0 : index
    %c0_24 = arith.constant 0 : index
    %56 = vector.load %arg8[%c7, %c0_23, %c0_24] : memref<9x1x256xf32, #tpu.memory_space<vmem>>, vector<1x1x256xf32>
    %57 = vector.shape_cast %56 : vector<1x1x256xf32> to vector<1x256xf32>
    %58 = vector.broadcast %57 : vector<1x256xf32> to vector<16x256xf32>
    %59 = arith.mulf %55, %58 : vector<16x256xf32>
    %60 = arith.addf %53, %59 : vector<16x256xf32>
    %61 = vector.extract_strided_slice %10 {offsets = [128, 0], sizes = [16, 256], strides = [1, 1]} : vector<144x256xf32> to vector<16x256xf32>
    %c239_i32 = arith.constant 239 : i32
    %62 = tpu.dynamic_rotate %61 by %c239_i32 dim 1 : vector<16x256xf32>, i32 -> vector<16x256xf32>
    %c8 = arith.constant 8 : index
    %c0_25 = arith.constant 0 : index
    %c0_26 = arith.constant 0 : index
    %63 = vector.load %arg8[%c8, %c0_25, %c0_26] : memref<9x1x256xf32, #tpu.memory_space<vmem>>, vector<1x1x256xf32>
    %64 = vector.shape_cast %63 : vector<1x1x256xf32> to vector<1x256xf32>
    %65 = vector.broadcast %64 : vector<1x256xf32> to vector<16x256xf32>
    %66 = arith.mulf %62, %65 : vector<16x256xf32>
    %67 = arith.addf %60, %66 : vector<16x256xf32>
    %c0_27 = arith.constant 0 : index
    %c0_28 = arith.constant 0 : index
    %68 = vector.load %arg5[%c0_27, %c0_28] : memref<16x1xf32, #tpu.memory_space<vmem>>, vector<16x1xf32>
    %69 = vector.broadcast %68 : vector<16x1xf32> to vector<16x256xf32>
    %70 = arith.addf %67, %69 : vector<16x256xf32>
    %cst_29 = arith.constant 0.000000e+00 : f32
    %71 = vector.broadcast %cst_29 : f32 to vector<16x256xf32>
    %72 = arith.maximumf %70, %71 : vector<16x256xf32>
    %c0_30 = arith.constant 0 : index
    %c0_31 = arith.constant 0 : index
    %73 = vector.load %arg6[%c0_30, %c0_31] : memref<64x16xf32, #tpu.memory_space<vmem>>, vector<64x16xf32>
    %cst_32 = arith.constant dense<0.000000e+00> : vector<64x256xf32>
    %74 = tpu.matmul %73, %72, %cst_32 {dimension_numbers = #tpu.dot_dimension_numbers<[1], [0], [0], [1], [0, 0, 1, 1], [], []>} : vector<64x16xf32>, vector<16x256xf32>, vector<64x256xf32> -> vector<64x256xf32>
    %c0_33 = arith.constant 0 : index
    %c0_34 = arith.constant 0 : index
    %75 = vector.load %arg7[%c0_33, %c0_34] : memref<64x1xf32, #tpu.memory_space<vmem>>, vector<64x1xf32>
    %76 = vector.broadcast %75 : vector<64x1xf32> to vector<64x256xf32>
    %77 = arith.addf %74, %76 : vector<64x256xf32>
    %78 = arith.addf %77, %1 : vector<64x256xf32>
    %cst_35 = arith.constant 0.000000e+00 : f32
    %79 = vector.broadcast %cst_35 : f32 to vector<64x256xf32>
    %80 = arith.maximumf %78, %79 : vector<64x256xf32>
    %c0_36 = arith.constant 0 : index
    %c0_37 = arith.constant 0 : index
    %c0_38 = arith.constant 0 : index
    %81 = vector.load %arg9[%c0_36, %c0_37, %c0_38] : memref<1x64x256xf32, #tpu.memory_space<vmem>>, vector<1x64x256xf32>
    %82 = vector.shape_cast %81 : vector<1x64x256xf32> to vector<64x256xf32>
    %83 = vector.shape_cast %80 : vector<64x256xf32> to vector<1x64x256xf32>
    tpu.vector_store %arg9[%c0_36, %c0_37, %c0_38], %83 {strides = array<i32>} : memref<1x64x256xf32, #tpu.memory_space<vmem>>, vector<1x64x256xf32>,
    return
  }
  func.func @transform_0(%arg0: i32) -> (i32, i32, i32) {
    %c0_i32 = arith.constant 0 : i32
    %c0_i32_0 = arith.constant 0 : i32
    %c0_i32_1 = arith.constant 0 : i32
    return %arg0, %c0_i32, %c0_i32_0 : i32, i32, i32
  }
  func.func @transform_1(%arg0: i32) -> (i32, i32) {
    %c0_i32 = arith.constant 0 : i32
    %c0_i32_0 = arith.constant 0 : i32
    %c0_i32_1 = arith.constant 0 : i32
    return %c0_i32, %c0_i32_0 : i32, i32
  }
  func.func @transform_2(%arg0: i32) -> (i32, i32) {
    %c0_i32 = arith.constant 0 : i32
    %c0_i32_0 = arith.constant 0 : i32
    %c0_i32_1 = arith.constant 0 : i32
    return %c0_i32, %c0_i32_0 : i32, i32
  }
  func.func @transform_3(%arg0: i32) -> (i32, i32) {
    %c0_i32 = arith.constant 0 : i32
    %c0_i32_0 = arith.constant 0 : i32
    %c0_i32_1 = arith.constant 0 : i32
    return %c0_i32, %c0_i32_0 : i32, i32
  }
  func.func @transform_4(%arg0: i32) -> (i32, i32) {
    %c0_i32 = arith.constant 0 : i32
    %c0_i32_0 = arith.constant 0 : i32
    %c0_i32_1 = arith.constant 0 : i32
    return %c0_i32, %c0_i32_0 : i32, i32
  }
  func.func @transform_5(%arg0: i32) -> (i32, i32) {
    %c0_i32 = arith.constant 0 : i32
    %c0_i32_0 = arith.constant 0 : i32
    %c0_i32_1 = arith.constant 0 : i32
    return %c0_i32, %c0_i32_0 : i32, i32
  }
  func.func @transform_6(%arg0: i32) -> (i32, i32) {
    %c0_i32 = arith.constant 0 : i32
    %c0_i32_0 = arith.constant 0 : i32
    %c0_i32_1 = arith.constant 0 : i32
    return %c0_i32, %c0_i32_0 : i32, i32
  }
  func.func @transform_7(%arg0: i32) -> (i32, i32, i32) {
    %c0_i32 = arith.constant 0 : i32
    %c0_i32_0 = arith.constant 0 : i32
    %c0_i32_1 = arith.constant 0 : i32
    %c0_i32_2 = arith.constant 0 : i32
    return %c0_i32, %c0_i32_0, %c0_i32_1 : i32, i32, i32
  }
  func.func @transform_8(%arg0: i32) -> (i32, i32, i32) {
    %c0_i32 = arith.constant 0 : i32
    %c0_i32_0 = arith.constant 0 : i32
    %c0_i32_1 = arith.constant 0 : i32
    return %arg0, %c0_i32, %c0_i32_0 : i32, i32, i32
  }
}

</mosaic_0001>

<llo_original>
// kernel: bottleneck_pallas.1
$region0: #{bottleneck_pallas.1}
  #allocation0 [shape = 'u32[]', space=smem, size = 0x4, offset = 0x4, fixed_abs, tag = 'smem constant byte address 0x4 - core index']
  #allocation1 [shape = 'u32[144,128]{1,0:T(1,128)}', space=vmem, size = 0x12000, scoped, tag = 'internal scratch']
  %s0 = inlined_call_operand.vmem [shape: f32[2,64,256], index: 0, kind: input, shape index: {}]
  %s1 = inlined_call_operand.vmem [shape: f32[16,64], index: 1, kind: input, shape index: {}]
  %s2 = inlined_call_operand.vmem [shape: f32[16,1], index: 2, kind: input, shape index: {}]
  %s3 = inlined_call_operand.vmem [shape: f32[144,16], index: 3, kind: input, shape index: {}]
  %s4 = inlined_call_operand.vmem [shape: f32[16,1], index: 4, kind: input, shape index: {}]
  %s5 = inlined_call_operand.vmem [shape: f32[64,16], index: 5, kind: input, shape index: {}]
  %s6 = inlined_call_operand.vmem [shape: f32[64,1], index: 6, kind: input, shape index: {}]
  %s7 = inlined_call_operand.vmem [shape: f32[9,1,256], index: 7, kind: input, shape index: {}]
  %s8 = inlined_call_operand.vmem [shape: f32[2,64,256], index: 8, kind: output, shape index: {}]
  %s9 = sld [smem:[#allocation0]]
  $region65: #{bottleneck_pallas.1} parent=0
    _
  %s11 = ssub.s32 1, %s9
  %s12 = scalar_select 0, %s11, %s9
  loop: start=0, step=1, limit=4
  $region2: #{bottleneck_pallas.1} parent=0 // loop_pre_header
    _
  $region3: #{bottleneck_pallas.1} parent=0 // loop_header
    %s14 = sphi 0, %s18
    %p15 = scmp.ge.s32.totalorder %s14, 4
    %s24 = sphi 0, %s26
    %s27 = sphi 0, %s24
    %s28 = sphi 0, %s27
    %s44 = sphi 0, %s28
    %s48 = sphi 0, %s48
    %s50 = sphi 0, %s48
    %s51 = sphi 0, %s50
    %s65 = sphi 0, %s51
    %s69 = sphi 0, %s69
    %s71 = sphi 0, %s69
    %s72 = sphi 0, %s71
    %s86 = sphi 0, %s72
    %s90 = sphi 0, %s90
    %s92 = sphi 0, %s90
    %s93 = sphi 0, %s92
    %s107 = sphi 0, %s93
    %s111 = sphi 0, %s111
    %s113 = sphi 0, %s111
    %s114 = sphi 0, %s113
    %s128 = sphi 0, %s114
    %s132 = sphi 0, %s132
    %s134 = sphi 0, %s132
    %s135 = sphi 0, %s134
    %s149 = sphi 0, %s135
    %s153 = sphi 0, %s153
    %s155 = sphi 0, %s153
    %s156 = sphi 0, %s155
    %s170 = sphi 0, %s156
    %s174 = sphi 0, %s174
    %s176 = sphi 0, %s174
    %s177 = sphi 0, %s176
    %s191 = sphi 0, %s177
    %s197 = sphi 0, %s199
    %s200 = sphi 0, %s197
    %s201 = sphi 0, %s200
    %s217 = sphi 0, %s201
  $region4: #{bottleneck_pallas.1} parent=0 // loop_header_branch
    %17 = sbr.rel (%p15) target = $region8
  $region5: #{bottleneck_pallas.1} parent=0 // loop_body
    %s19 = ssub.s32 %s14, 1
    %s20 = ssub.s32 %s14, 2
    %s21 = sadd.s32 %s14, 1
    %s22 = ssub.s32 %s14, %s21
    %p23 = scmp.eq.s32.totalorder %s22, 0
    %s25 = sadd.s32 %s24, 1
    %s26 = scalar_select %p23, %s24, %s25
    %p29 = pneg %p23
    %p30 = scmp.eq.s32.totalorder %s14, 1
    %p31 = por %p29, %p30
    %p32 = scmp.ne.s32.totalorder %s24, %s27
    %p33 = scmp.eq.s32.totalorder %s14, 0
    %p34 = por %p32, %p33
    %p35 = scmp.ne.s32.totalorder %s24, %s27
    %p36 = scmp.eq.s32.totalorder %s19, 1
    %p37 = por %p35, %p36
    %p38 = scmp.ne.s32.totalorder %s27, %s28
    %p39 = scmp.eq.s32.totalorder %s19, 0
    %p40 = por %p38, %p39
    %p41 = scmp.ne.s32.totalorder %s27, %s28
    %p42 = scmp.eq.s32.totalorder %s20, 1
    %p43 = por %p41, %p42
    %p45 = scmp.ne.s32.totalorder %s28, %s44
    %p46 = scmp.eq.s32.totalorder %s20, 0
    %p47 = por %p45, %p46
    %s49 = sadd.s32 %s48, 1
    %p52 = scmp.eq.s32.totalorder %s14, 1
    %p53 = scmp.ne.s32.totalorder %s48, %s50
    %p54 = scmp.eq.s32.totalorder %s14, 0
    %p55 = por %p53, %p54
    %p56 = scmp.ne.s32.totalorder %s48, %s50
    %p57 = scmp.eq.s32.totalorder %s19, 1
    %p58 = por %p56, %p57
    %p59 = scmp.ne.s32.totalorder %s50, %s51
    %p60 = scmp.eq.s32.totalorder %s19, 0
    %p61 = por %p59, %p60
    %p62 = scmp.ne.s32.totalorder %s50, %s51
    %p63 = scmp.eq.s32.totalorder %s20, 1
    %p64 = por %p62, %p63
    %p66 = scmp.ne.s32.totalorder %s51, %s65
    %p67 = scmp.eq.s32.totalorder %s20, 0
    %p68 = por %p66, %p67
    %s70 = sadd.s32 %s69, 1
    %p73 = scmp.eq.s32.totalorder %s14, 1
    %p74 = scmp.ne.s32.totalorder %s69, %s71
    %p75 = scmp.eq.s32.totalorder %s14, 0
    %p76 = por %p74, %p75
    %p77 = scmp.ne.s32.totalorder %s69, %s71
    %p78 = scmp.eq.s32.totalorder %s19, 1
    %p79 = por %p77, %p78
    %p80 = scmp.ne.s32.totalorder %s71, %s72
    %p81 = scmp.eq.s32.totalorder %s19, 0
    %p82 = por %p80, %p81
    %p83 = scmp.ne.s32.totalorder %s71, %s72
    %p84 = scmp.eq.s32.totalorder %s20, 1
    %p85 = por %p83, %p84
    %p87 = scmp.ne.s32.totalorder %s72, %s86
    %p88 = scmp.eq.s32.totalorder %s20, 0
    %p89 = por %p87, %p88
    %s91 = sadd.s32 %s90, 1
    %p94 = scmp.eq.s32.totalorder %s14, 1
    %p95 = scmp.ne.s32.totalorder %s90, %s92
    %p96 = scmp.eq.s32.totalorder %s14, 0
    %p97 = por %p95, %p96
    %p98 = scmp.ne.s32.totalorder %s90, %s92
    %p99 = scmp.eq.s32.totalorder %s19, 1
    %p100 = por %p98, %p99
    %p101 = scmp.ne.s32.totalorder %s92, %s93
    %p102 = scmp.eq.s32.totalorder %s19, 0
    %p103 = por %p101, %p102
    %p104 = scmp.ne.s32.totalorder %s92, %s93
    %p105 = scmp.eq.s32.totalorder %s20, 1
    %p106 = por %p104, %p105
    %p108 = scmp.ne.s32.totalorder %s93, %s107
    %p109 = scmp.eq.s32.totalorder %s20, 0
    %p110 = por %p108, %p109
    %s112 = sadd.s32 %s111, 1
    %p115 = scmp.eq.s32.totalorder %s14, 1
    %p116 = scmp.ne.s32.totalorder %s111, %s113
    %p117 = scmp.eq.s32.totalorder %s14, 0
    %p118 = por %p116, %p117
    %p119 = scmp.ne.s32.totalorder %s111, %s113
    %p120 = scmp.eq.s32.totalorder %s19, 1
    %p121 = por %p119, %p120
    %p122 = scmp.ne.s32.totalorder %s113, %s114
    %p123 = scmp.eq.s32.totalorder %s19, 0
    %p124 = por %p122, %p123
    %p125 = scmp.ne.s32.totalorder %s113, %s114
    %p126 = scmp.eq.s32.totalorder %s20, 1
    %p127 = por %p125, %p126
    %p129 = scmp.ne.s32.totalorder %s114, %s128
    %p130 = scmp.eq.s32.totalorder %s20, 0
    %p131 = por %p129, %p130
    %s133 = sadd.s32 %s132, 1
    %p136 = scmp.eq.s32.totalorder %s14, 1
    %p137 = scmp.ne.s32.totalorder %s132, %s134
    %p138 = scmp.eq.s32.totalorder %s14, 0
    %p139 = por %p137, %p138
    %p140 = scmp.ne.s32.totalorder %s132, %s134
    %p141 = scmp.eq.s32.totalorder %s19, 1
    %p142 = por %p140, %p141
    %p143 = scmp.ne.s32.totalorder %s134, %s135
    %p144 = scmp.eq.s32.totalorder %s19, 0
    %p145 = por %p143, %p144
    %p146 = scmp.ne.s32.totalorder %s134, %s135
    %p147 = scmp.eq.s32.totalorder %s20, 1
    %p148 = por %p146, %p147
    %p150 = scmp.ne.s32.totalorder %s135, %s149
    %p151 = scmp.eq.s32.totalorder %s20, 0
    %p152 = por %p150, %p151
    %s154 = sadd.s32 %s153, 1
    %p157 = scmp.eq.s32.totalorder %s14, 1
    %p158 = scmp.ne.s32.totalorder %s153, %s155
    %p159 = scmp.eq.s32.totalorder %s14, 0
    %p160 = por %p158, %p159
    %p161 = scmp.ne.s32.totalorder %s153, %s155
    %p162 = scmp.eq.s32.totalorder %s19, 1
    %p163 = por %p161, %p162
    %p164 = scmp.ne.s32.totalorder %s155, %s156
    %p165 = scmp.eq.s32.totalorder %s19, 0
    %p166 = por %p164, %p165
    %p167 = scmp.ne.s32.totalorder %s155, %s156
    %p168 = scmp.eq.s32.totalorder %s20, 1
    %p169 = por %p167, %p168
    %p171 = scmp.ne.s32.totalorder %s156, %s170
    %p172 = scmp.eq.s32.totalorder %s20, 0
    %p173 = por %p171, %p172
    %s175 = sadd.s32 %s174, 1
    %p178 = scmp.eq.s32.totalorder %s14, 1
    %p179 = scmp.ne.s32.totalorder %s174, %s176
    %p180 = scmp.eq.s32.totalorder %s14, 0
    %p181 = por %p179, %p180
    %p182 = scmp.ne.s32.totalorder %s174, %s176
    %p183 = scmp.eq.s32.totalorder %s19, 1
    %p184 = por %p182, %p183
    %p185 = scmp.ne.s32.totalorder %s176, %s177
    %p186 = scmp.eq.s32.totalorder %s19, 0
    %p187 = por %p185, %p186
    %p188 = scmp.ne.s32.totalorder %s176, %s177
    %p189 = scmp.eq.s32.totalorder %s20, 1
    %p190 = por %p188, %p189
    %p192 = scmp.ne.s32.totalorder %s177, %s191
    %p193 = scmp.eq.s32.totalorder %s20, 0
    %p194 = por %p192, %p193
    %s195 = ssub.s32 %s14, %s21
    %p196 = scmp.eq.s32.totalorder %s195, 0
    %s198 = sadd.s32 %s197, 1
    %s199 = scalar_select %p196, %s197, %s198
    %p202 = pneg %p196
    %p203 = scmp.eq.s32.totalorder %s14, 1
    %p204 = por %p202, %p203
    %p205 = scmp.ne.s32.totalorder %s197, %s200
    %p206 = scmp.eq.s32.totalorder %s14, 0
    %p207 = por %p205, %p206
    %p208 = scmp.ne.s32.totalorder %s197, %s200
    %p209 = scmp.eq.s32.totalorder %s19, 1
    %p210 = por %p208, %p209
    %p211 = scmp.ne.s32.totalorder %s200, %s201
    %p212 = scmp.eq.s32.totalorder %s19, 0
    %p213 = por %p211, %p212
    %p214 = scmp.ne.s32.totalorder %s200, %s201
    %p215 = scmp.eq.s32.totalorder %s20, 1
    %p216 = por %p214, %p215
    %p218 = scmp.ne.s32.totalorder %s201, %s217
    %p219 = scmp.eq.s32.totalorder %s20, 0
    %p220 = por %p218, %p219
    %p221 = scmp.le.s32.totalorder 1, %s14
    %p222 = scmp.lt.s32.totalorder %s14, 3
    %p223 = pnand %p221, %p222
    %p224 = pneg %p223
    // Predicated region
    $region9: #{bottleneck_pallas.1} parent=5 // pred_check
      _
    $region10: #{bottleneck_pallas.1} parent=5 // pred_check_branch
      %226 = sbr.rel (%p223) target = $region12
    $region11: #{bottleneck_pallas.1} parent=5 // pred_region
      %s227 = ssub.s32 %s14, 1
      // Predicated region
      $region13: #{bottleneck_pallas.1} parent=11 // pred_check
        %p228 = pneg %p61
      $region14: #{bottleneck_pallas.1} parent=11 // pred_check_branch
        %230 = sbr.rel (%p228) target = $region16
      $region15: #{bottleneck_pallas.1} parent=11 // pred_region
        _
      $region16: #{bottleneck_pallas.1} parent=11 // pred_fallthru
        _
      // Predicated region
      $region17: #{bottleneck_pallas.1} parent=11 // pred_check
        %p231 = pneg %p82
      $region18: #{bottleneck_pallas.1} parent=11 // pred_check_branch
        %233 = sbr.rel (%p231) target = $region20
      $region19: #{bottleneck_pallas.1} parent=11 // pred_region
        _
      $region20: #{bottleneck_pallas.1} parent=11 // pred_fallthru
        _
      // Predicated region
      $region21: #{bottleneck_pallas.1} parent=11 // pred_check
        %p234 = pneg %p103
      $region22: #{bottleneck_pallas.1} parent=11 // pred_check_branch
        %236 = sbr.rel (%p234) target = $region24
      $region23: #{bottleneck_pallas.1} parent=11 // pred_region
        _
      $region24: #{bottleneck_pallas.1} parent=11 // pred_fallthru
        _
      // Predicated region
      $region25: #{bottleneck_pallas.1} parent=11 // pred_check
        %p237 = pneg %p124
      $region26: #{bottleneck_pallas.1} parent=11 // pred_check_branch
        %239 = sbr.rel (%p237) target = $region28
      $region27: #{bottleneck_pallas.1} parent=11 // pred_region
        _
      $region28: #{bottleneck_pallas.1} parent=11 // pred_fallthru
        _
      // Predicated region
      $region29: #{bottleneck_pallas.1} parent=11 // pred_check
        %p240 = pneg %p145
      $region30: #{bottleneck_pallas.1} parent=11 // pred_check_branch
        %242 = sbr.rel (%p240) target = $region32
      $region31: #{bottleneck_pallas.1} parent=11 // pred_region
        _
      $region32: #{bottleneck_pallas.1} parent=11 // pred_fallthru
        _
      // Predicated region
      $region33: #{bottleneck_pallas.1} parent=11 // pred_check
        %p243 = pneg %p166
      $region34: #{bottleneck_pallas.1} parent=11 // pred_check_branch
        %245 = sbr.rel (%p243) target = $region36
      $region35: #{bottleneck_pallas.1} parent=11 // pred_region
        _
      $region36: #{bottleneck_pallas.1} parent=11 // pred_fallthru
        _
      // Predicated region
      $region37: #{bottleneck_pallas.1} parent=11 // pred_check
        %p246 = pneg %p187
      $region38: #{bottleneck_pallas.1} parent=11 // pred_check_branch
        %248 = sbr.rel (%p246) target = $region40
      $region39: #{bottleneck_pallas.1} parent=11 // pred_region
        _
      $region40: #{bottleneck_pallas.1} parent=11 // pred_fallthru
        _
    $region12: #{bottleneck_pallas.1} parent=5 // pred_fallthru
      _
    %p249 = scmp.lt.s32.totalorder %s14, 2
    // Predicated region
    $region41: #{bottleneck_pallas.1} parent=5 // pred_check
      %p250 = pneg %p249
    $region42: #{bottleneck_pallas.1} parent=5 // pred_check_branch
      %252 = sbr.rel (%p250) target = $region44
    $region43: #{bottleneck_pallas.1} parent=5 // pred_region
      // Predicated region
      $region45: #{bottleneck_pallas.1} parent=43 // pred_check
        %p253 = pneg %p34
      $region46: #{bottleneck_pallas.1} parent=43 // pred_check_branch
        %255 = sbr.rel (%p253) target = $region48
      $region47: #{bottleneck_pallas.1} parent=43 // pred_region
        %p256 = scmp.lt.s32.totalorder %s14, 1
        %s257 = scalar_select %p256, %s14, 1
        %s258 = smul.addr %s257, 16
        %s259 = smul.addr %s258, 8
        %s260 = scalar_lea.vmem %s0, %s259
      $region48: #{bottleneck_pallas.1} parent=43 // pred_fallthru
        _
    $region44: #{bottleneck_pallas.1} parent=5 // pred_fallthru
      _
    %p261 = scmp.le.s32.totalorder 1, %s14
    %p262 = scmp.lt.s32.totalorder %s14, 3
    %p263 = pnand %p261, %p262
    %p264 = pneg %p263
    // Predicated region
    $region49: #{bottleneck_pallas.1} parent=5 // pred_check
      _
    $region50: #{bottleneck_pallas.1} parent=5 // pred_check_branch
      %266 = sbr.rel (%p263) target = $region52
    $region51: #{bottleneck_pallas.1} parent=5 // pred_region
      %s267 = ssub.s32 %s14, 1
      %p268 = scmp.lt.s32.totalorder %s19, 1
      %s269 = scalar_select %p268, %s19, 1
      %s270 = smul.addr %s269, 16
      %s271 = smul.addr %s270, 8
      %s272 = scalar_lea.vmem %s0, %s271
      %p273 = pneg %p40
      %p274 = pneg %p37
      %p275 = pneg %p61
      %p276 = pneg %p58
      %p277 = pneg %p82
      %p278 = pneg %p79
      %p279 = pneg %p103
      %p280 = pneg %p100
      %p281 = pneg %p124
      %p282 = pneg %p121
      %p283 = pneg %p145
      %p284 = pneg %p142
      %p285 = pneg %p166
      %p286 = pneg %p163
      %p287 = pneg %p187
      %p288 = pneg %p184
      %p289 = pneg %p213
      %p290 = pneg %p210
      %p291 = scmp.lt.s32.totalorder %s19, 1
      %s292 = scalar_select %p291, %s19, 1
      %s293 = smul.addr %s292, 16
      %s294 = smul.addr %s293, 8
      %s295 = scalar_lea.vmem %s8, %s294
      %p296 = scmp.lt.s32.totalorder %s19, 1
      %s297 = scalar_select %p296, %s19, 1
      %s298 = smul.addr %s297, 16
      %s299 = smul.addr %s298, 8
      %s300 = scalar_lea.vmem %s0, %s299
      %p301 = scmp.lt.s32.totalorder %s19, 1
      %s302 = scalar_select %p301, %s19, 1
      %s303 = smul.addr %s302, 16
      %s304 = smul.addr %s303, 8
      %s305 = scalar_lea.vmem %s8, %s304
      %v306 = vld [vmem:[%s300] sm:$0xff]
      %v307 = vld [vmem:[%s300 + $0x8] sm:$0xff]
      %v308 = vld [vmem:[%s300 + $0x10] sm:$0xff]
      %v309 = vld [vmem:[%s300 + $0x18] sm:$0xff]
      %v310 = vld [vmem:[%s300 + $0x20] sm:$0xff]
      %v311 = vld [vmem:[%s300 + $0x28] sm:$0xff]
      %v312 = vld [vmem:[%s300 + $0x30] sm:$0xff]
      %v313 = vld [vmem:[%s300 + $0x38] sm:$0xff]
      %v314 = vld [vmem:[%s300 + $0x40] sm:$0xff]
      %v315 = vld [vmem:[%s300 + $0x48] sm:$0xff]
      %v316 = vld [vmem:[%s300 + $0x50] sm:$0xff]
      %v317 = vld [vmem:[%s300 + $0x58] sm:$0xff]
      %v318 = vld [vmem:[%s300 + $0x60] sm:$0xff]
      %v319 = vld [vmem:[%s300 + $0x68] sm:$0xff]
      %v320 = vld [vmem:[%s300 + $0x70] sm:$0xff]
      %v321 = vld [vmem:[%s300 + $0x78] sm:$0xff]
      %v322 = vld [vmem:[%s1] sm:$0xff]
      %v323 = vld [vmem:[%s1 + $0x8] sm:$0xff]
      %v324 = vld [vmem:[%s2] sm:$0xff]
      %v325 = vld [vmem:[%s2 + $0x8] sm:$0xff]
      %327 = vset.pattern.permute.xlu0 0
      %328 = vperm.xlu0 %327, %v324
      %v329 = vpop.permute.xlu0 %328
      %332 = vset.pattern.permute.xlu0 0
      %333 = vperm.xlu0 %332, %v325
      %v334 = vpop.permute.xlu0 %333
      %vm336 = vcmask 523264
      %v338 = vsel %vm336, %v322, 0
      %v341 = vsel %vm336, %v323, 0
      %343 = vmatprep.subr.mxu0 0.0
      %344 = vmatpush1.msra.mxu0 0.0
      %345 = vmatprep.subr.mxu0 0.0
      %346 = vmatpush1.msra.mxu0 0.0
      %347 = vmatprep.subr.mxu0 0.0
      %348 = vmatpush1.msra.mxu0 0.0
      %349 = vmatprep.subr.mxu0 0.0
      %350 = vmatpush1.msra.mxu0 0.0
      %351 = vmatprep.subr.mxu0 0.0
      %352 = vmatpush1.msra.mxu0 0.0
      %353 = vmatprep.subr.mxu0 0.0
      %354 = vmatpush1.msra.mxu0 0.0
      %355 = vmatprep.subr.mxu0 0.0
      %356 = vmatpush1.msra.mxu0 0.0
      %357 = vmatprep.subr.mxu0 0.0
      %358 = vmatpush1.msra.mxu0 0.0
      %359 = vmatprep.subr.mxu0 %v321
      %360 = vmatpush1.msra.mxu0 %v320
      %361 = vmatprep.subr.mxu0 %v319
      %362 = vmatpush1.msra.mxu0 %v318
      %363 = vmatprep.subr.mxu0 %v317
      %364 = vmatpush1.msra.mxu0 %v316
      %365 = vmatprep.subr.mxu0 %v315
      %366 = vmatpush1.msra.mxu0 %v314
      %367 = vmatprep.subr.mxu0 %v313
      %368 = vmatpush1.msra.mxu0 %v312
      %369 = vmatprep.subr.mxu0 %v311
      %370 = vmatpush1.msra.mxu0 %v310
      %371 = vmatprep.subr.mxu0 %v309
      %372 = vmatpush1.msra.mxu0 %v308
      %373 = vmatprep.subr.mxu0 %v307
      %374 = vmatpush1.msra.mxu0 %v306
      %375 = vmatprep.subr.mxu0 0.0
      %376 = vmatpush2.msra.mxu0 0.0
      %377 = vmatprep.subr.mxu0 0.0
      %378 = vmatpush2.msra.mxu0 0.0
      %379 = vmatprep.subr.mxu0 0.0
      %380 = vmatpush2.msra.mxu0 0.0
      %381 = vmatprep.subr.mxu0 0.0
      %382 = vmatpush2.msra.mxu0 0.0
      %383 = vmatprep.subr.mxu0 0.0
      %384 = vmatpush2.msra.mxu0 0.0
      %385 = vmatprep.subr.mxu0 0.0
      %386 = vmatpush2.msra.mxu0 0.0
      %387 = vmatprep.subr.mxu0 0.0
      %388 = vmatpush2.msra.mxu0 0.0
      %389 = vmatprep.subr.mxu0 0.0
      %390 = vmatpush2.msra.mxu0 0.0
      %391 = vmatprep.subr.mxu0 0.0
      %392 = vmatpush2.msra.mxu0 0.0
      %393 = vmatprep.subr.mxu0 0.0
      %394 = vmatpush2.msra.mxu0 0.0
      %395 = vmatprep.subr.mxu0 0.0
      %396 = vmatpush2.msra.mxu0 0.0
      %397 = vmatprep.subr.mxu0 0.0
      %398 = vmatpush2.msra.mxu0 0.0
      %399 = vmatprep.subr.mxu0 0.0
      %400 = vmatpush2.msra.mxu0 0.0
      %401 = vmatprep.subr.mxu0 0.0
      %402 = vmatpush2.msra.mxu0 0.0
      %403 = vmatprep.subr.mxu0 0.0
      %404 = vmatpush2.msra.mxu0 0.0
      %405 = vmatprep.subr.mxu0 0.0
      %406 = vmatpush2.msra.mxu0 0.0
      %407 = vmatprep.mubr.f32.mxu0 0.0
      %408 = vmatmul.mubr.f32.gmra.mxu0 %v338
      %v409 = vpop.f32.mrf.mxu0
      %v410 = vadd.f32 %v329, %v409
      %v411 = vpop.f32.mrf.mxu0
      %v412 = vadd.f32 %v329, %v411
      %413 = vmatprep.mubr.f32.mxu0 0.0
      %414 = vmatmul.mubr.f32.gmra.mxu0 %v341
      %v415 = vpop.f32.mrf.mxu0
      %v416 = vadd.f32 %v334, %v415
      %v417 = vpop.f32.mrf.mxu0
      %v418 = vadd.f32 %v334, %v417
      %419 = vdwg.mxu0
      %v420 = vmax.f32 %v410, 0.0
      %v421 = vmax.f32 %v412, 0.0
      %v422 = vmax.f32 %v416, 0.0
      %v423 = vmax.f32 %v418, 0.0
      %v424 = vld [vmem:[%s3] sm:$0xff]
      %v425 = vld [vmem:[%s3 + $0x8] sm:$0xff]
      %v426 = vld [vmem:[%s3 + $0x10] sm:$0xff]
      %v427 = vld [vmem:[%s3 + $0x18] sm:$0xff]
      %v428 = vld [vmem:[%s3 + $0x20] sm:$0xff]
      %v429 = vld [vmem:[%s3 + $0x28] sm:$0xff]
      %v430 = vld [vmem:[%s3 + $0x30] sm:$0xff]
      %v431 = vld [vmem:[%s3 + $0x38] sm:$0xff]
      %v432 = vld [vmem:[%s3 + $0x40] sm:$0xff]
      %v433 = vld [vmem:[%s3 + $0x48] sm:$0xff]
      %v434 = vld [vmem:[%s3 + $0x50] sm:$0xff]
      %v435 = vld [vmem:[%s3 + $0x58] sm:$0xff]
      %v436 = vld [vmem:[%s3 + $0x60] sm:$0xff]
      %v437 = vld [vmem:[%s3 + $0x68] sm:$0xff]
      %v438 = vld [vmem:[%s3 + $0x70] sm:$0xff]
      %v439 = vld [vmem:[%s3 + $0x78] sm:$0xff]
      %v440 = vld [vmem:[%s3 + $0x80] sm:$0xff]
      %v441 = vld [vmem:[%s3 + $0x88] sm:$0xff]
      %vm442 = vcmask 130048
      %v444 = vsel %vm442, %v424, 0
      %v447 = vsel %vm442, %v425, 0
      %v450 = vsel %vm442, %v426, 0
      %v453 = vsel %vm442, %v427, 0
      %v456 = vsel %vm442, %v428, 0
      %v459 = vsel %vm442, %v429, 0
      %v462 = vsel %vm442, %v430, 0
      %v465 = vsel %vm442, %v431, 0
      %v468 = vsel %vm442, %v432, 0
      %v471 = vsel %vm442, %v433, 0
      %v474 = vsel %vm442, %v434, 0
      %v477 = vsel %vm442, %v435, 0
      %v480 = vsel %vm442, %v436, 0
      %v483 = vsel %vm442, %v437, 0
      %v486 = vsel %vm442, %v438, 0
      %v489 = vsel %vm442, %v439, 0
      %v492 = vsel %vm442, %v440, 0
      %v495 = vsel %vm442, %v441, 0
      %497 = vmatprep.subr.mxu0 0.0
      %498 = vmatpush1.msra.mxu0 0.0
      %499 = vmatprep.subr.mxu0 0.0
      %500 = vmatpush1.msra.mxu0 0.0
      %501 = vmatprep.subr.mxu0 0.0
      %502 = vmatpush1.msra.mxu0 0.0
      %503 = vmatprep.subr.mxu0 0.0
      %504 = vmatpush1.msra.mxu0 0.0
      %505 = vmatprep.subr.mxu0 0.0
      %506 = vmatpush1.msra.mxu0 0.0
      %507 = vmatprep.subr.mxu0 0.0
      %508 = vmatpush1.msra.mxu0 0.0
      %509 = vmatprep.subr.mxu0 0.0
      %510 = vmatpush1.msra.mxu0 0.0
      %511 = vmatprep.subr.mxu0 0.0
      %512 = vmatpush1.msra.mxu0 0.0
      %513 = vmatprep.subr.mxu0 0.0
      %514 = vmatpush1.msra.mxu0 0.0
      %515 = vmatprep.subr.mxu0 0.0
      %516 = vmatpush1.msra.mxu0 0.0
      %517 = vmatprep.subr.mxu0 0.0
      %518 = vmatpush1.msra.mxu0 0.0
      %519 = vmatprep.subr.mxu0 0.0
      %520 = vmatpush1.msra.mxu0 0.0
      %521 = vmatprep.subr.mxu0 0.0
      %522 = vmatpush1.msra.mxu0 0.0
      %523 = vmatprep.subr.mxu0 0.0
      %524 = vmatpush1.msra.mxu0 0.0
      %525 = vmatprep.subr.mxu0 %v423
      %526 = vmatpush1.msra.mxu0 %v422
      %527 = vmatprep.subr.mxu0 %v421
      %528 = vmatpush1.msra.mxu0 %v420
      %529 = vmatprep.subr.mxu0 0.0
      %530 = vmatpush2.msra.mxu0 0.0
      %531 = vmatprep.subr.mxu0 0.0
      %532 = vmatpush2.msra.mxu0 0.0
      %533 = vmatprep.subr.mxu0 0.0
      %534 = vmatpush2.msra.mxu0 0.0
      %535 = vmatprep.subr.mxu0 0.0
      %536 = vmatpush2.msra.mxu0 0.0
      %537 = vmatprep.subr.mxu0 0.0
      %538 = vmatpush2.msra.mxu0 0.0
      %539 = vmatprep.subr.mxu0 0.0
      %540 = vmatpush2.msra.mxu0 0.0
      %541 = vmatprep.subr.mxu0 0.0
      %542 = vmatpush2.msra.mxu0 0.0
      %543 = vmatprep.subr.mxu0 0.0
      %544 = vmatpush2.msra.mxu0 0.0
      %545 = vmatprep.subr.mxu0 0.0
      %546 = vmatpush2.msra.mxu0 0.0
      %547 = vmatprep.subr.mxu0 0.0
      %548 = vmatpush2.msra.mxu0 0.0
      %549 = vmatprep.subr.mxu0 0.0
      %550 = vmatpush2.msra.mxu0 0.0
      %551 = vmatprep.subr.mxu0 0.0
      %552 = vmatpush2.msra.mxu0 0.0
      %553 = vmatprep.subr.mxu0 0.0
      %554 = vmatpush2.msra.mxu0 0.0
      %555 = vmatprep.subr.mxu0 0.0
      %556 = vmatpush2.msra.mxu0 0.0
      %557 = vmatprep.subr.mxu0 0.0
      %558 = vmatpush2.msra.mxu0 0.0
      %559 = vmatprep.subr.mxu0 0.0
      %560 = vmatpush2.msra.mxu0 0.0
      %561 = vmatprep.mubr.f32.mxu0 0.0
      %562 = vmatmul.mubr.f32.gmra.mxu0 %v444
      %v563 = vpop.f32.mrf.mxu0
      %v564 = vadd.f32 0.0, %v563
      %v565 = vpop.f32.mrf.mxu0
      %v566 = vadd.f32 0.0, %v565
      %567 = vmatprep.mubr.f32.mxu0 0.0
      %568 = vmatmul.mubr.f32.gmra.mxu0 %v447
      %v569 = vpop.f32.mrf.mxu0
      %v570 = vadd.f32 0.0, %v569
      %v571 = vpop.f32.mrf.mxu0
      %v572 = vadd.f32 0.0, %v571
      %573 = vmatprep.mubr.f32.mxu0 0.0
      %574 = vmatmul.mubr.f32.gmra.mxu0 %v450
      %v575 = vpop.f32.mrf.mxu0
      %v576 = vadd.f32 0.0, %v575
      %v577 = vpop.f32.mrf.mxu0
      %v578 = vadd.f32 0.0, %v577
      %579 = vmatprep.mubr.f32.mxu0 0.0
      %580 = vmatmul.mubr.f32.gmra.mxu0 %v453
      %v581 = vpop.f32.mrf.mxu0
      %v582 = vadd.f32 0.0, %v581
      %v583 = vpop.f32.mrf.mxu0
      %v584 = vadd.f32 0.0, %v583
      %585 = vmatprep.mubr.f32.mxu0 0.0
      %586 = vmatmul.mubr.f32.gmra.mxu0 %v456
      %v587 = vpop.f32.mrf.mxu0
      %v588 = vadd.f32 0.0, %v587
      %v589 = vpop.f32.mrf.mxu0
      %v590 = vadd.f32 0.0, %v589
      %591 = vmatprep.mubr.f32.mxu0 0.0
      %592 = vmatmul.mubr.f32.gmra.mxu0 %v459
      %v593 = vpop.f32.mrf.mxu0
      %v594 = vadd.f32 0.0, %v593
      %v595 = vpop.f32.mrf.mxu0
      %v596 = vadd.f32 0.0, %v595
      %597 = vmatprep.mubr.f32.mxu0 0.0
      %598 = vmatmul.mubr.f32.gmra.mxu0 %v462
      %v599 = vpop.f32.mrf.mxu0
      %v600 = vadd.f32 0.0, %v599
      %v601 = vpop.f32.mrf.mxu0
      %v602 = vadd.f32 0.0, %v601
      %603 = vmatprep.mubr.f32.mxu0 0.0
      %604 = vmatmul.mubr.f32.gmra.mxu0 %v465
      %v605 = vpop.f32.mrf.mxu0
      %v606 = vadd.f32 0.0, %v605
      %v607 = vpop.f32.mrf.mxu0
      %v608 = vadd.f32 0.0, %v607
      %609 = vmatprep.mubr.f32.mxu0 0.0
      %610 = vmatmul.mubr.f32.gmra.mxu0 %v468
      %v611 = vpop.f32.mrf.mxu0
      %v612 = vadd.f32 0.0, %v611
      %v613 = vpop.f32.mrf.mxu0
      %v614 = vadd.f32 0.0, %v613
      %615 = vmatprep.mubr.f32.mxu0 0.0
      %616 = vmatmul.mubr.f32.gmra.mxu0 %v471
      %v617 = vpop.f32.mrf.mxu0
      %v618 = vadd.f32 0.0, %v617
      %v619 = vpop.f32.mrf.mxu0
      %v620 = vadd.f32 0.0, %v619
      %621 = vmatprep.mubr.f32.mxu0 0.0
      %622 = vmatmul.mubr.f32.gmra.mxu0 %v474
      %v623 = vpop.f32.mrf.mxu0
      %v624 = vadd.f32 0.0, %v623
      %v625 = vpop.f32.mrf.mxu0
      %v626 = vadd.f32 0.0, %v625
      %627 = vmatprep.mubr.f32.mxu0 0.0
      %628 = vmatmul.mubr.f32.gmra.mxu0 %v477
      %v629 = vpop.f32.mrf.mxu0
      %v630 = vadd.f32 0.0, %v629
      %v631 = vpop.f32.mrf.mxu0
      %v632 = vadd.f32 0.0, %v631
      %633 = vmatprep.mubr.f32.mxu0 0.0
      %634 = vmatmul.mubr.f32.gmra.mxu0 %v480
      %v635 = vpop.f32.mrf.mxu0
      %v636 = vadd.f32 0.0, %v635
      %v637 = vpop.f32.mrf.mxu0
      %v638 = vadd.f32 0.0, %v637
      %639 = vmatprep.mubr.f32.mxu0 0.0
      %640 = vmatmul.mubr.f32.gmra.mxu0 %v483
      %v641 = vpop.f32.mrf.mxu0
      %v642 = vadd.f32 0.0, %v641
      %v643 = vpop.f32.mrf.mxu0
      %v644 = vadd.f32 0.0, %v643
      %645 = vmatprep.mubr.f32.mxu0 0.0
      %646 = vmatmul.mubr.f32.gmra.mxu0 %v486
      %v647 = vpop.f32.mrf.mxu0
      %v648 = vadd.f32 0.0, %v647
      %v649 = vpop.f32.mrf.mxu0
      %v650 = vadd.f32 0.0, %v649
      %651 = vmatprep.mubr.f32.mxu0 0.0
      %652 = vmatmul.mubr.f32.gmra.mxu0 %v489
      %v653 = vpop.f32.mrf.mxu0
      %v654 = vadd.f32 0.0, %v653
      %v655 = vpop.f32.mrf.mxu0
      %v656 = vadd.f32 0.0, %v655
      %657 = vmatprep.mubr.f32.mxu0 0.0
      %658 = vmatmul.mubr.f32.gmra.mxu0 %v492
      %v659 = vpop.f32.mrf.mxu0
      %v660 = vadd.f32 0.0, %v659
      %v661 = vpop.f32.mrf.mxu0
      %v662 = vadd.f32 0.0, %v661
      %663 = vmatprep.mubr.f32.mxu0 0.0
      %664 = vmatmul.mubr.f32.gmra.mxu0 %v495
      %v665 = vpop.f32.mrf.mxu0
      %v666 = vadd.f32 0.0, %v665
      %v667 = vpop.f32.mrf.mxu0
      %v668 = vadd.f32 0.0, %v667
      %669 = vdwg.mxu0
      %670 = vrot.lane.b32.xlu0 %v564, 17
      %v671 = vpop.permute.xlu0 %670
      %672 = vrot.lane.b32.xlu0 %v570, 17
      %v673 = vpop.permute.xlu0 %672
      %674 = vrot.lane.b32.xlu0 %v566, 17
      %v675 = vpop.permute.xlu0 %674
      %676 = vrot.lane.b32.xlu0 %v572, 17
      %v677 = vpop.permute.xlu0 %676
      %v678 = vlaneseq
      %v679 = vand.u32 %v678, 127
      %vm680 = vcmp.lt.s32.totalorder %v679, 17
      %v681 = vsel %vm680, %v671, %v675
      %v682 = vsel %vm680, %v673, %v677
      %v683 = vsel %vm680, %v675, %v671
      %v684 = vsel %vm680, %v677, %v673
      %v685 = vld [vmem:[%s7] sm:$0x3]
      %v687 = vlaneseq
      %v688 = vshrl.u32 %v687, 7
      %v689 = vsub.s32 0, %v688
      %v690 = vrot.slane %v685, %v689
      %v691 = vlaneseq
      %v692 = vshrl.u32 %v691, 7
      %v693 = vsub.s32 1, %v692
      %v694 = vrot.slane %v685, %v693
      %v697 = vmul.f32 %v683, %v690
      %v698 = vmul.f32 %v681, %v694
      %v699 = vmul.f32 %v684, %v690
      %v700 = vmul.f32 %v682, %v694
      %v701 = vadd.f32 %v612, %v697
      %v702 = vadd.f32 %v614, %v698
      %v703 = vadd.f32 %v618, %v699
      %v704 = vadd.f32 %v620, %v700
      %705 = vrot.lane.b32.xlu0 %v576, 16
      %v706 = vpop.permute.xlu0 %705
      %707 = vrot.lane.b32.xlu0 %v582, 16
      %v708 = vpop.permute.xlu0 %707
      %709 = vrot.lane.b32.xlu0 %v578, 16
      %v710 = vpop.permute.xlu0 %709
      %711 = vrot.lane.b32.xlu0 %v584, 16
      %v712 = vpop.permute.xlu0 %711
      %vm713 = vcmp.lt.s32.totalorder %v679, 16
      %v714 = vsel %vm713, %v706, %v710
      %v715 = vsel %vm713, %v708, %v712
      %v716 = vsel %vm713, %v710, %v706
      %v717 = vsel %vm713, %v712, %v708
      %s718 = scalar_lea.vmem %s7, 2
      %v719 = vld [vmem:[%s718] sm:$0x3]
      %v721 = vlaneseq
      %v722 = vshrl.u32 %v721, 7
      %v723 = vsub.s32 0, %v722
      %v724 = vrot.slane %v719, %v723
      %v725 = vlaneseq
      %v726 = vshrl.u32 %v725, 7
      %v727 = vsub.s32 1, %v726
      %v728 = vrot.slane %v719, %v727
      %v731 = vmul.f32 %v716, %v724
      %v732 = vmul.f32 %v714, %v728
      %v733 = vmul.f32 %v717, %v724
      %v734 = vmul.f32 %v715, %v728
      %v735 = vadd.f32 %v701, %v731
      %v736 = vadd.f32 %v702, %v732
      %v737 = vadd.f32 %v703, %v733
      %v738 = vadd.f32 %v704, %v734
      %739 = vrot.lane.b32.xlu0 %v588, 15
      %v740 = vpop.permute.xlu0 %739
      %741 = vrot.lane.b32.xlu0 %v594, 15
      %v742 = vpop.permute.xlu0 %741
      %743 = vrot.lane.b32.xlu0 %v590, 15
      %v744 = vpop.permute.xlu0 %743
      %745 = vrot.lane.b32.xlu0 %v596, 15
      %v746 = vpop.permute.xlu0 %745
      %vm747 = vcmp.lt.s32.totalorder %v679, 15
      %v748 = vsel %vm747, %v740, %v744
      %v749 = vsel %vm747, %v742, %v746
      %v750 = vsel %vm747, %v744, %v740
      %v751 = vsel %vm747, %v746, %v742
      %s752 = scalar_lea.vmem %s7, 4
      %v753 = vld [vmem:[%s752] sm:$0x3]
      %v755 = vlaneseq
      %v756 = vshrl.u32 %v755, 7
      %v757 = vsub.s32 0, %v756
      %v758 = vrot.slane %v753, %v757
      %v759 = vlaneseq
      %v760 = vshrl.u32 %v759, 7
      %v761 = vsub.s32 1, %v760
      %v762 = vrot.slane %v753, %v761
      %v765 = vmul.f32 %v750, %v758
      %v766 = vmul.f32 %v748, %v762
      %v767 = vmul.f32 %v751, %v758
      %v768 = vmul.f32 %v749, %v762
      %v769 = vadd.f32 %v735, %v765
      %v770 = vadd.f32 %v736, %v766
      %v771 = vadd.f32 %v737, %v767
      %v772 = vadd.f32 %v738, %v768
      %773 = vrot.lane.b32.xlu0 %v600, 1
      %v774 = vpop.permute.xlu0 %773
      %775 = vrot.lane.b32.xlu0 %v606, 1
      %v776 = vpop.permute.xlu0 %775
      %777 = vrot.lane.b32.xlu0 %v602, 1
      %v778 = vpop.permute.xlu0 %777
      %779 = vrot.lane.b32.xlu0 %v608, 1
      %v780 = vpop.permute.xlu0 %779
      %vm781 = vcmp.lt.s32.totalorder %v679, 1
      %v782 = vsel %vm781, %v774, %v778
      %v783 = vsel %vm781, %v776, %v780
      %v784 = vsel %vm781, %v778, %v774
      %v785 = vsel %vm781, %v780, %v776
      %s786 = scalar_lea.vmem %s7, 6
      %v787 = vld [vmem:[%s786] sm:$0x3]
      %v789 = vlaneseq
      %v790 = vshrl.u32 %v789, 7
      %v791 = vsub.s32 0, %v790
      %v792 = vrot.slane %v787, %v791
      %v793 = vlaneseq
      %v794 = vshrl.u32 %v793, 7
      %v795 = vsub.s32 1, %v794
      %v796 = vrot.slane %v787, %v795
      %v799 = vmul.f32 %v784, %v792
      %v800 = vmul.f32 %v782, %v796
      %v801 = vmul.f32 %v785, %v792
      %v802 = vmul.f32 %v783, %v796
      %v803 = vadd.f32 %v769, %v799
      %v804 = vadd.f32 %v770, %v800
      %v805 = vadd.f32 %v771, %v801
      %v806 = vadd.f32 %v772, %v802
      %807 = vrot.lane.b32.xlu0 %v624, 127
      %v808 = vpop.permute.xlu0 %807
      %809 = vrot.lane.b32.xlu0 %v630, 127
      %v810 = vpop.permute.xlu0 %809
      %811 = vrot.lane.b32.xlu0 %v626, 127
      %v812 = vpop.permute.xlu0 %811
      %813 = vrot.lane.b32.xlu0 %v632, 127
      %v814 = vpop.permute.xlu0 %813
      %vm815 = vcmp.lt.s32.totalorder %v679, 127
      %v816 = vsel %vm815, %v808, %v812
      %v817 = vsel %vm815, %v810, %v814
      %v818 = vsel %vm815, %v812, %v808
      %v819 = vsel %vm815, %v814, %v810
      %s820 = scalar_lea.vmem %s7, 10
      %v821 = vld [vmem:[%s820] sm:$0x3]
      %v823 = vlaneseq
      %v824 = vshrl.u32 %v823, 7
      %v825 = vsub.s32 0, %v824
      %v826 = vrot.slane %v821, %v825
      %v827 = vlaneseq
      %v828 = vshrl.u32 %v827, 7
      %v829 = vsub.s32 1, %v828
      %v830 = vrot.slane %v821, %v829
      %v833 = vmul.f32 %v816, %v826
      %v834 = vmul.f32 %v818, %v830
      %v835 = vmul.f32 %v817, %v826
      %v836 = vmul.f32 %v819, %v830
      %v837 = vadd.f32 %v803, %v833
      %v838 = vadd.f32 %v804, %v834
      %v839 = vadd.f32 %v805, %v835
      %v840 = vadd.f32 %v806, %v836
      %841 = vrot.lane.b32.xlu0 %v636, 113
      %v842 = vpop.permute.xlu0 %841
      %843 = vrot.lane.b32.xlu0 %v642, 113
      %v844 = vpop.permute.xlu0 %843
      %845 = vrot.lane.b32.xlu0 %v638, 113
      %v846 = vpop.permute.xlu0 %845
      %847 = vrot.lane.b32.xlu0 %v644, 113
      %v848 = vpop.permute.xlu0 %847
      %vm849 = vcmp.lt.s32.totalorder %v679, 113
      %v850 = vsel %vm849, %v842, %v846
      %v851 = vsel %vm849, %v844, %v848
      %v852 = vsel %vm849, %v846, %v842
      %v853 = vsel %vm849, %v848, %v844
      %s854 = scalar_lea.vmem %s7, 12
      %v855 = vld [vmem:[%s854] sm:$0x3]
      %v857 = vlaneseq
      %v858 = vshrl.u32 %v857, 7
      %v859 = vsub.s32 0, %v858
      %v860 = vrot.slane %v855, %v859
      %v861 = vlaneseq
      %v862 = vshrl.u32 %v861, 7
      %v863 = vsub.s32 1, %v862
      %v864 = vrot.slane %v855, %v863
      %v867 = vmul.f32 %v850, %v860
      %v868 = vmul.f32 %v852, %v864
      %v869 = vmul.f32 %v851, %v860
      %v870 = vmul.f32 %v853, %v864
      %v871 = vadd.f32 %v837, %v867
      %v872 = vadd.f32 %v838, %v868
      %v873 = vadd.f32 %v839, %v869
      %v874 = vadd.f32 %v840, %v870
      %875 = vrot.lane.b32.xlu0 %v648, 112
      %v876 = vpop.permute.xlu0 %875
      %877 = vrot.lane.b32.xlu0 %v654, 112
      %v878 = vpop.permute.xlu0 %877
      %879 = vrot.lane.b32.xlu0 %v650, 112
      %v880 = vpop.permute.xlu0 %879
      %881 = vrot.lane.b32.xlu0 %v656, 112
      %v882 = vpop.permute.xlu0 %881
      %vm883 = vcmp.lt.s32.totalorder %v679, 112
      %v884 = vsel %vm883, %v876, %v880
      %v885 = vsel %vm883, %v878, %v882
      %v886 = vsel %vm883, %v880, %v876
      %v887 = vsel %vm883, %v882, %v878
      %s888 = scalar_lea.vmem %s7, 14
      %v889 = vld [vmem:[%s888] sm:$0x3]
      %v891 = vlaneseq
      %v892 = vshrl.u32 %v891, 7
      %v893 = vsub.s32 0, %v892
      %v894 = vrot.slane %v889, %v893
      %v895 = vlaneseq
      %v896 = vshrl.u32 %v895, 7
      %v897 = vsub.s32 1, %v896
      %v898 = vrot.slane %v889, %v897
      %v901 = vmul.f32 %v884, %v894
      %v902 = vmul.f32 %v886, %v898
      %v903 = vmul.f32 %v885, %v894
      %v904 = vmul.f32 %v887, %v898
      %v905 = vadd.f32 %v871, %v901
      %v906 = vadd.f32 %v872, %v902
      %v907 = vadd.f32 %v873, %v903
      %v908 = vadd.f32 %v874, %v904
      %909 = vrot.lane.b32.xlu0 %v660, 111
      %v910 = vpop.permute.xlu0 %909
      %911 = vrot.lane.b32.xlu0 %v666, 111
      %v912 = vpop.permute.xlu0 %911
      %913 = vrot.lane.b32.xlu0 %v662, 111
      %v914 = vpop.permute.xlu0 %913
      %915 = vrot.lane.b32.xlu0 %v668, 111
      %v916 = vpop.permute.xlu0 %915
      %vm917 = vcmp.lt.s32.totalorder %v679, 111
      %v918 = vsel %vm917, %v910, %v914
      %v919 = vsel %vm917, %v912, %v916
      %v920 = vsel %vm917, %v914, %v910
      %v921 = vsel %vm917, %v916, %v912
      %s922 = scalar_lea.vmem %s7, 16
      %v923 = vld [vmem:[%s922] sm:$0x3]
      %v925 = vlaneseq
      %v926 = vshrl.u32 %v925, 7
      %v927 = vsub.s32 0, %v926
      %v928 = vrot.slane %v923, %v927
      %v929 = vlaneseq
      %v930 = vshrl.u32 %v929, 7
      %v931 = vsub.s32 1, %v930
      %v932 = vrot.slane %v923, %v931
      %v935 = vmul.f32 %v918, %v928
      %v936 = vmul.f32 %v920, %v932
      %v937 = vmul.f32 %v919, %v928
      %v938 = vmul.f32 %v921, %v932
      %v939 = vadd.f32 %v905, %v935
      %v940 = vadd.f32 %v906, %v936
      %v941 = vadd.f32 %v907, %v937
      %v942 = vadd.f32 %v908, %v938
      %v943 = vld [vmem:[%s4] sm:$0xff]
      %v944 = vld [vmem:[%s4 + $0x8] sm:$0xff]
      %946 = vset.pattern.permute.xlu0 0
      %947 = vperm.xlu0 %946, %v943
      %v948 = vpop.permute.xlu0 %947
      %951 = vset.pattern.permute.xlu0 0
      %952 = vperm.xlu0 %951, %v944
      %v953 = vpop.permute.xlu0 %952
      %v955 = vadd.f32 %v939, %v948
      %v956 = vadd.f32 %v940, %v948
      %v957 = vadd.f32 %v941, %v953
      %v958 = vadd.f32 %v942, %v953
      %v959 = vmax.f32 %v955, 0.0
      %v960 = vmax.f32 %v956, 0.0
      %v961 = vmax.f32 %v957, 0.0
      %v962 = vmax.f32 %v958, 0.0
      %v963 = vld [vmem:[%s5] sm:$0xff]
      %v964 = vld [vmem:[%s5 + $0x8] sm:$0xff]
      %v965 = vld [vmem:[%s5 + $0x10] sm:$0xff]
      %v966 = vld [vmem:[%s5 + $0x18] sm:$0xff]
      %v967 = vld [vmem:[%s5 + $0x20] sm:$0xff]
      %v968 = vld [vmem:[%s5 + $0x28] sm:$0xff]
      %v969 = vld [vmem:[%s5 + $0x30] sm:$0xff]
      %v970 = vld [vmem:[%s5 + $0x38] sm:$0xff]
      %v971 = vld [vmem:[%s6] sm:$0xff]
      %v972 = vld [vmem:[%s6 + $0x8] sm:$0xff]
      %v973 = vld [vmem:[%s6 + $0x10] sm:$0xff]
      %v974 = vld [vmem:[%s6 + $0x18] sm:$0xff]
      %v975 = vld [vmem:[%s6 + $0x20] sm:$0xff]
      %v976 = vld [vmem:[%s6 + $0x28] sm:$0xff]
      %v977 = vld [vmem:[%s6 + $0x30] sm:$0xff]
      %v978 = vld [vmem:[%s6 + $0x38] sm:$0xff]
      %980 = vset.pattern.permute.xlu0 0
      %981 = vperm.xlu0 %980, %v971
      %v982 = vpop.permute.xlu0 %981
      %985 = vset.pattern.permute.xlu0 0
      %986 = vperm.xlu0 %985, %v972
      %v987 = vpop.permute.xlu0 %986
      %990 = vset.pattern.permute.xlu0 0
      %991 = vperm.xlu0 %990, %v973
      %v992 = vpop.permute.xlu0 %991
      %995 = vset.pattern.permute.xlu0 0
      %996 = vperm.xlu0 %995, %v974
      %v997 = vpop.permute.xlu0 %996
      %1000 = vset.pattern.permute.xlu0 0
      %1001 = vperm.xlu0 %1000, %v975
      %v1002 = vpop.permute.xlu0 %1001
      %1005 = vset.pattern.permute.xlu0 0
      %1006 = vperm.xlu0 %1005, %v976
      %v1007 = vpop.permute.xlu0 %1006
      %1010 = vset.pattern.permute.xlu0 0
      %1011 = vperm.xlu0 %1010, %v977
      %v1012 = vpop.permute.xlu0 %1011
      %1015 = vset.pattern.permute.xlu0 0
      %1016 = vperm.xlu0 %1015, %v978
      %v1017 = vpop.permute.xlu0 %1016
      %v1020 = vsel %vm442, %v963, 0
      %v1023 = vsel %vm442, %v964, 0
      %v1026 = vsel %vm442, %v965, 0
      %v1029 = vsel %vm442, %v966, 0
      %v1032 = vsel %vm442, %v967, 0
      %v1035 = vsel %vm442, %v968, 0
      %v1038 = vsel %vm442, %v969, 0
      %v1041 = vsel %vm442, %v970, 0
      %1043 = vmatprep.subr.mxu0 0.0
      %1044 = vmatpush1.msra.mxu0 0.0
      %1045 = vmatprep.subr.mxu0 0.0
      %1046 = vmatpush1.msra.mxu0 0.0
      %1047 = vmatprep.subr.mxu0 0.0
      %1048 = vmatpush1.msra.mxu0 0.0
      %1049 = vmatprep.subr.mxu0 0.0
      %1050 = vmatpush1.msra.mxu0 0.0
      %1051 = vmatprep.subr.mxu0 0.0
      %1052 = vmatpush1.msra.mxu0 0.0
      %1053 = vmatprep.subr.mxu0 0.0
      %1054 = vmatpush1.msra.mxu0 0.0
      %1055 = vmatprep.subr.mxu0 0.0
      %1056 = vmatpush1.msra.mxu0 0.0
      %1057 = vmatprep.subr.mxu0 0.0
      %1058 = vmatpush1.msra.mxu0 0.0
      %1059 = vmatprep.subr.mxu0 0.0
      %1060 = vmatpush1.msra.mxu0 0.0
      %1061 = vmatprep.subr.mxu0 0.0
      %1062 = vmatpush1.msra.mxu0 0.0
      %1063 = vmatprep.subr.mxu0 0.0
      %1064 = vmatpush1.msra.mxu0 0.0
      %1065 = vmatprep.subr.mxu0 0.0
      %1066 = vmatpush1.msra.mxu0 0.0
      %1067 = vmatprep.subr.mxu0 0.0
      %1068 = vmatpush1.msra.mxu0 0.0
      %1069 = vmatprep.subr.mxu0 0.0
      %1070 = vmatpush1.msra.mxu0 0.0
      %1071 = vmatprep.subr.mxu0 %v962
      %1072 = vmatpush1.msra.mxu0 %v961
      %1073 = vmatprep.subr.mxu0 %v960
      %1074 = vmatpush1.msra.mxu0 %v959
      %1075 = vmatprep.subr.mxu0 0.0
      %1076 = vmatpush2.msra.mxu0 0.0
      %1077 = vmatprep.subr.mxu0 0.0
      %1078 = vmatpush2.msra.mxu0 0.0
      %1079 = vmatprep.subr.mxu0 0.0
      %1080 = vmatpush2.msra.mxu0 0.0
      %1081 = vmatprep.subr.mxu0 0.0
      %1082 = vmatpush2.msra.mxu0 0.0
      %1083 = vmatprep.subr.mxu0 0.0
      %1084 = vmatpush2.msra.mxu0 0.0
      %1085 = vmatprep.subr.mxu0 0.0
      %1086 = vmatpush2.msra.mxu0 0.0
      %1087 = vmatprep.subr.mxu0 0.0
      %1088 = vmatpush2.msra.mxu0 0.0
      %1089 = vmatprep.subr.mxu0 0.0
      %1090 = vmatpush2.msra.mxu0 0.0
      %1091 = vmatprep.subr.mxu0 0.0
      %1092 = vmatpush2.msra.mxu0 0.0
      %1093 = vmatprep.subr.mxu0 0.0
      %1094 = vmatpush2.msra.mxu0 0.0
      %1095 = vmatprep.subr.mxu0 0.0
      %1096 = vmatpush2.msra.mxu0 0.0
      %1097 = vmatprep.subr.mxu0 0.0
      %1098 = vmatpush2.msra.mxu0 0.0
      %1099 = vmatprep.subr.mxu0 0.0
      %1100 = vmatpush2.msra.mxu0 0.0
      %1101 = vmatprep.subr.mxu0 0.0
      %1102 = vmatpush2.msra.mxu0 0.0
      %1103 = vmatprep.subr.mxu0 0.0
      %1104 = vmatpush2.msra.mxu0 0.0
      %1105 = vmatprep.subr.mxu0 0.0
      %1106 = vmatpush2.msra.mxu0 0.0
      %1107 = vmatprep.mubr.f32.mxu0 0.0
      %1108 = vmatmul.mubr.f32.gmra.mxu0 %v1020
      %v1109 = vpop.f32.mrf.mxu0
      %v1110 = vadd.f32 %v982, %v1109
      %v1111 = vpop.f32.mrf.mxu0
      %v1112 = vadd.f32 %v982, %v1111
      %1113 = vmatprep.mubr.f32.mxu0 0.0
      %1114 = vmatmul.mubr.f32.gmra.mxu0 %v1023
      %v1115 = vpop.f32.mrf.mxu0
      %v1116 = vadd.f32 %v987, %v1115
      %v1117 = vpop.f32.mrf.mxu0
      %v1118 = vadd.f32 %v987, %v1117
      %1119 = vmatprep.mubr.f32.mxu0 0.0
      %1120 = vmatmul.mubr.f32.gmra.mxu0 %v1026
      %v1121 = vpop.f32.mrf.mxu0
      %v1122 = vadd.f32 %v992, %v1121
      %v1123 = vpop.f32.mrf.mxu0
      %v1124 = vadd.f32 %v992, %v1123
      %1125 = vmatprep.mubr.f32.mxu0 0.0
      %1126 = vmatmul.mubr.f32.gmra.mxu0 %v1029
      %v1127 = vpop.f32.mrf.mxu0
      %v1128 = vadd.f32 %v997, %v1127
      %v1129 = vpop.f32.mrf.mxu0
      %v1130 = vadd.f32 %v997, %v1129
      %1131 = vmatprep.mubr.f32.mxu0 0.0
      %1132 = vmatmul.mubr.f32.gmra.mxu0 %v1032
      %v1133 = vpop.f32.mrf.mxu0
      %v1134 = vadd.f32 %v1002, %v1133
      %v1135 = vpop.f32.mrf.mxu0
      %v1136 = vadd.f32 %v1002, %v1135
      %1137 = vmatprep.mubr.f32.mxu0 0.0
      %1138 = vmatmul.mubr.f32.gmra.mxu0 %v1035
      %v1139 = vpop.f32.mrf.mxu0
      %v1140 = vadd.f32 %v1007, %v1139
      %v1141 = vpop.f32.mrf.mxu0
      %v1142 = vadd.f32 %v1007, %v1141
      %1143 = vmatprep.mubr.f32.mxu0 0.0
      %1144 = vmatmul.mubr.f32.gmra.mxu0 %v1038
      %v1145 = vpop.f32.mrf.mxu0
      %v1146 = vadd.f32 %v1012, %v1145
      %v1147 = vpop.f32.mrf.mxu0
      %v1148 = vadd.f32 %v1012, %v1147
      %1149 = vmatprep.mubr.f32.mxu0 0.0
      %1150 = vmatmul.mubr.f32.gmra.mxu0 %v1041
      %v1151 = vpop.f32.mrf.mxu0
      %v1152 = vadd.f32 %v1017, %v1151
      %v1153 = vpop.f32.mrf.mxu0
      %v1154 = vadd.f32 %v1017, %v1153
      %1155 = vdwg.mxu0
      %v1156 = vadd.f32 %v1110, %v306
      %v1157 = vadd.f32 %v1112, %v307
      %v1158 = vadd.f32 %v1116, %v308
      %v1159 = vadd.f32 %v1118, %v309
      %v1160 = vadd.f32 %v1122, %v310
      %v1161 = vadd.f32 %v1124, %v311
      %v1162 = vadd.f32 %v1128, %v312
      %v1163 = vadd.f32 %v1130, %v313
      %v1164 = vadd.f32 %v1134, %v314
      %v1165 = vadd.f32 %v1136, %v315
      %v1166 = vadd.f32 %v1140, %v316
      %v1167 = vadd.f32 %v1142, %v317
      %v1168 = vadd.f32 %v1146, %v318
      %v1169 = vadd.f32 %v1148, %v319
      %v1170 = vadd.f32 %v1152, %v320
      %v1171 = vadd.f32 %v1154, %v321
      %v1172 = vmax.f32 %v1156, 0.0
      %v1173 = vmax.f32 %v1157, 0.0
      %v1174 = vmax.f32 %v1158, 0.0
      %v1175 = vmax.f32 %v1159, 0.0
      %v1176 = vmax.f32 %v1160, 0.0
      %v1177 = vmax.f32 %v1161, 0.0
      %v1178 = vmax.f32 %v1162, 0.0
      %v1179 = vmax.f32 %v1163, 0.0
      %v1180 = vmax.f32 %v1164, 0.0
      %v1181 = vmax.f32 %v1165, 0.0
      %v1182 = vmax.f32 %v1166, 0.0
      %v1183 = vmax.f32 %v1167, 0.0
      %v1184 = vmax.f32 %v1168, 0.0
      %v1185 = vmax.f32 %v1169, 0.0
      %v1186 = vmax.f32 %v1170, 0.0
      %v1187 = vmax.f32 %v1171, 0.0
      %1188 = vst [vmem:[%s305] sm:$0xff] %v1172
      %1189 = vst [vmem:[%s305 + $0x8] sm:$0xff] %v1173
      %1190 = vst [vmem:[%s305 + $0x10] sm:$0xff] %v1174
      %1191 = vst [vmem:[%s305 + $0x18] sm:$0xff] %v1175
      %1192 = vst [vmem:[%s305 + $0x20] sm:$0xff] %v1176
      %1193 = vst [vmem:[%s305 + $0x28] sm:$0xff] %v1177
      %1194 = vst [vmem:[%s305 + $0x30] sm:$0xff] %v1178
      %1195 = vst [vmem:[%s305 + $0x38] sm:$0xff] %v1179
      %1196 = vst [vmem:[%s305 + $0x40] sm:$0xff] %v1180
      %1197 = vst [vmem:[%s305 + $0x48] sm:$0xff] %v1181
      %1198 = vst [vmem:[%s305 + $0x50] sm:$0xff] %v1182
      %1199 = vst [vmem:[%s305 + $0x58] sm:$0xff] %v1183
      %1200 = vst [vmem:[%s305 + $0x60] sm:$0xff] %v1184
      %1201 = vst [vmem:[%s305 + $0x68] sm:$0xff] %v1185
      %1202 = vst [vmem:[%s305 + $0x70] sm:$0xff] %v1186
      %1203 = vst [vmem:[%s305 + $0x78] sm:$0xff] %v1187
      %p1204 = scmp.lt.s32.totalorder %s19, 1
      %s1205 = scalar_select %p1204, %s19, 1
      %s1206 = smul.addr %s1205, 16
      %s1207 = smul.addr %s1206, 8
      %s1208 = scalar_lea.vmem %s8, %s1207
      // Predicated region
      $region53: #{bottleneck_pallas.1} parent=51 // pred_check
        %p1209 = pneg %p210
      $region54: #{bottleneck_pallas.1} parent=51 // pred_check_branch
        %1211 = sbr.rel (%p1209) target = $region56
      $region55: #{bottleneck_pallas.1} parent=51 // pred_region
        _
      $region56: #{bottleneck_pallas.1} parent=51 // pred_fallthru
        _
    $region52: #{bottleneck_pallas.1} parent=5 // pred_fallthru
      _
    %p1212 = scmp.le.s32.totalorder 2, %s14
    // Predicated region
    $region57: #{bottleneck_pallas.1} parent=5 // pred_check
      %p1213 = pneg %p1212
    $region58: #{bottleneck_pallas.1} parent=5 // pred_check_branch
      %1215 = sbr.rel (%p1213) target = $region60
    $region59: #{bottleneck_pallas.1} parent=5 // pred_region
      %s1216 = ssub.s32 %s14, 2
      // Predicated region
      $region61: #{bottleneck_pallas.1} parent=59 // pred_check
        %p1217 = pneg %p216
      $region62: #{bottleneck_pallas.1} parent=59 // pred_check_branch
        %1219 = sbr.rel (%p1217) target = $region64
      $region63: #{bottleneck_pallas.1} parent=59 // pred_region
        %p1220 = scmp.lt.s32.totalorder %s20, 1
        %s1221 = scalar_select %p1220, %s20, 1
        %s1222 = smul.addr %s1221, 16
        %s1223 = smul.addr %s1222, 8
        %s1224 = scalar_lea.vmem %s8, %s1223
      $region64: #{bottleneck_pallas.1} parent=59 // pred_fallthru
        _
    $region60: #{bottleneck_pallas.1} parent=5 // pred_fallthru
      _
  $region6: #{bottleneck_pallas.1} parent=0 // loop_footer
    %s18 = sadd.s32 1, %s14
  $region7: #{bottleneck_pallas.1} parent=0 // loop_footer_branch
    %13 = sbr.rel target = $region3
  $region8: #{bottleneck_pallas.1} parent=0 // loop_exit
    _

</llo_original>
